<compile_context>
chip_gen: v7x
topology: tpu7x:2x2x1
jax: 0.10.0
libtpu: 0.0.40
codegen_flags: <defaults>
</compile_context>

<pallas_src>
import functools

import jax
import jax.numpy as jnp
from jax import lax
from jax.experimental import pallas as pl
from jax.experimental.pallas import tpu as pltpu

_LANES = 128
# 1024 x 128 f32 = 512 KiB per input tile; 2 inputs x 2 pipeline buffers = 2 MiB,
# well within scoped VMEM on v5e (16 MiB), v6e (32 MiB) and v7x (32 MiB default).
_MAX_TILE_ROWS = 1024


def _copy_paste_loss_kernel(xn_ref, xc_ref, out_ref, *, bs, tile_rows, inv_bs):
    i = pl.program_id(0)

    @pl.when(i == 0)
    def _init():
        out_ref[0, 0] = 0.0

    # Cast after load (inputs may be bf16 upstream; keeps HBM reads narrow).
    xn = xn_ref[...].astype(jnp.float32)  # logits with target = 0
    xc = xc_ref[...].astype(jnp.float32)  # logits with target = 1

    # Stable BCEWithLogits:
    #   target = 0 -> softplus(x)  = max(x, 0)  + log1p(exp(-|x|))
    #   target = 1 -> softplus(-x) = max(-x, 0) + log1p(exp(-|x|))
    bce_n = jnp.maximum(xn, 0.0) + jnp.log1p(jnp.exp(-jnp.abs(xn)))
    bce_c = jnp.maximum(-xc, 0.0) + jnp.log1p(jnp.exp(-jnp.abs(xc)))

    # Mask out lane/tile padding beyond the true batch size.
    row = lax.broadcasted_iota(jnp.int32, (tile_rows, _LANES), 0)
    lane = lax.broadcasted_iota(jnp.int32, (tile_rows, _LANES), 1)
    flat_idx = (i * tile_rows + row) * _LANES + lane
    total = jnp.where(flat_idx < bs, bce_n + bce_c, 0.0)

    out_ref[0, 0] += jnp.sum(total)

    @pl.when(i == pl.num_programs(0) - 1)
    def _finalize():
        out_ref[0, 0] = out_ref[0, 0] * inv_bs


def copy_paste_loss(preds_normal, preds_copy_paste):
    """JAX/Pallas equivalent of CopyPasteLoss.forward. Returns a scalar f32."""
    bs = preds_normal.shape[0]
    assert preds_copy_paste.shape[0] == bs, (
        "preds_normal and preds_copy_paste must share the batch dimension")
    assert bs > 0

    # Lane-dense layout: flatten (bs, 1) -> (bs,), pad to rows_padded x 128.
    rows = pl.cdiv(bs, _LANES)
    tile_rows = min(_MAX_TILE_ROWS, ((rows + 7) // 8) * 8)  # multiple of 8 sublanes
    num_tiles = pl.cdiv(rows, tile_rows)
    rows_padded = num_tiles * tile_rows
    padded_len = rows_padded * _LANES

    def to_lane_dense(x):
        flat = x.reshape(-1)
        flat = jnp.pad(flat, (0, padded_len - bs))
        return flat.reshape(rows_padded, _LANES)

    xn = to_lane_dense(preds_normal)
    xc = to_lane_dense(preds_copy_paste)

    kernel = functools.partial(
        _copy_paste_loss_kernel, bs=bs, tile_rows=tile_rows, inv_bs=1.0 / bs)

    out = pl.pallas_call(
        kernel,
        out_shape=jax.ShapeDtypeStruct((1, 1), jnp.float32),
        grid=(num_tiles,),
        in_specs=[
            pl.BlockSpec((tile_rows, _LANES), lambda i: (i, 0)),
            pl.BlockSpec((tile_rows, _LANES), lambda i: (i, 0)),
        ],
        out_specs=pl.BlockSpec((1, 1), lambda i: (0, 0),
                               memory_space=pltpu.SMEM),
        compiler_params=pltpu.CompilerParams(
            dimension_semantics=("arbitrary",)),
    )(xn, xc)
    return out[0, 0]


def _reference_loss(preds_normal, preds_copy_paste):
    # Pure-JAX reference (matches torch.nn.BCEWithLogitsLoss semantics).
    xn = preds_normal.astype(jnp.float32)
    xc = preds_copy_paste.astype(jnp.float32)
    bce_n = jnp.maximum(xn, 0.0) + jnp.log1p(jnp.exp(-jnp.abs(xn)))
    bce_c = jnp.maximum(xc, 0.0) - xc + jnp.log1p(jnp.exp(-jnp.abs(xc)))
    return jnp.mean(bce_n + bce_c)


if __name__ == "__main__":
    bs = 8
    key = jax.random.PRNGKey(0)
    k1, k2 = jax.random.split(key)
    preds_normal = jax.random.normal(k1, (bs, 1), dtype=jnp.float32)
    preds_copy_paste = jax.random.normal(k2, (bs, 1), dtype=jnp.float32)

    loss = copy_paste_loss(preds_normal, preds_copy_paste)
    loss = jax.block_until_ready(loss)

    ref = _reference_loss(preds_normal, preds_copy_paste)
    assert jnp.allclose(loss, ref, rtol=1e-5, atol=1e-6), (loss, ref)

    print("KERNEL_OK")
</pallas_src>

<mosaic_0001>
module attributes {stable_mosaic.version = 11 : i64} {
  func.func @_copy_paste_loss_kernel(%arg0: i32, %arg1: memref<8x128xf32, #tpu.memory_space<vmem>>, %arg2: memref<8x128xf32, #tpu.memory_space<vmem>>, %arg3: memref<1x1xf32, #tpu.memory_space<smem>>) attributes {dimension_semantics = [#tpu.dimension_semantics<arbitrary>], iteration_bounds = array<i64: 1>, scalar_prefetch = 0 : i64, scratch_operands = 0 : i64, tpu.core_type = #tpu.core_type<tc>, window_params = [{transform_indices = @transform_0, window_bounds = array<i64: 8, 128>}, {transform_indices = @transform_1, window_bounds = array<i64: 8, 128>}, {transform_indices = @transform_2, window_bounds = array<i64: 1, 1>}]} {
    %c0_i32 = arith.constant 0 : i32
    %0 = arith.cmpi eq, %arg0, %c0_i32 : i32
    %1 = arith.extui %0 : i1 to i32
    %c0_i32_0 = arith.constant 0 : i32
    %2 = arith.cmpi ne, %1, %c0_i32_0 : i32
    scf.if %2 {
      %cst_17 = arith.constant 0.000000e+00 : f32
      %c0_18 = arith.constant 0 : index
      %c0_19 = arith.constant 0 : index
      %46 = memref.load %arg3[%c0_18, %c0_19] : memref<1x1xf32, #tpu.memory_space<smem>>
      memref.store %cst_17, %arg3[%c0_18, %c0_19] : memref<1x1xf32, #tpu.memory_space<smem>>
    } else {
    }
    %c0 = arith.constant 0 : index
    %c0_1 = arith.constant 0 : index
    %3 = vector.load %arg1[%c0, %c0_1] : memref<8x128xf32, #tpu.memory_space<vmem>>, vector<8x128xf32>
    %c0_2 = arith.constant 0 : index
    %c0_3 = arith.constant 0 : index
    %4 = vector.load %arg2[%c0_2, %c0_3] : memref<8x128xf32, #tpu.memory_space<vmem>>, vector<8x128xf32>
    %cst = arith.constant 0.000000e+00 : f32
    %5 = vector.broadcast %cst : f32 to vector<8x128xf32>
    %6 = arith.maximumf %3, %5 : vector<8x128xf32>
    %7 = math.absf %3 : vector<8x128xf32>
    %cst_4 = arith.constant 0.000000e+00 : f32
    %8 = vector.broadcast %cst_4 : f32 to vector<8x128xf32>
    %9 = arith.subf %8, %7 : vector<8x128xf32>
    %10 = math.exp %9 : vector<8x128xf32>
    %11 = math.log1p %10 : vector<8x128xf32>
    %12 = arith.addf %6, %11 : vector<8x128xf32>
    %cst_5 = arith.constant 0.000000e+00 : f32
    %13 = vector.broadcast %cst_5 : f32 to vector<8x128xf32>
    %14 = arith.subf %13, %4 : vector<8x128xf32>
    %cst_6 = arith.constant 0.000000e+00 : f32
    %15 = vector.broadcast %cst_6 : f32 to vector<8x128xf32>
    %16 = arith.maximumf %14, %15 : vector<8x128xf32>
    %17 = math.absf %4 : vector<8x128xf32>
    %cst_7 = arith.constant 0.000000e+00 : f32
    %18 = vector.broadcast %cst_7 : f32 to vector<8x128xf32>
    %19 = arith.subf %18, %17 : vector<8x128xf32>
    %20 = math.exp %19 : vector<8x128xf32>
    %21 = math.log1p %20 : vector<8x128xf32>
    %22 = arith.addf %16, %21 : vector<8x128xf32>
    %23 = tpu.iota {dimensions = array<i32: 0>} : vector<8x128xi32>
    %24 = tpu.iota {dimensions = array<i32: 1>} : vector<8x128xi32>
    %c8_i32 = arith.constant 8 : i32
    %25 = arith.muli %arg0, %c8_i32 : i32
    %26 = vector.broadcast %25 : i32 to vector<8x128xi32>
    %27 = arith.addi %26, %23 : vector<8x128xi32>
    %c128_i32 = arith.constant 128 : i32
    %28 = vector.broadcast %c128_i32 : i32 to vector<8x128xi32>
    %29 = arith.muli %27, %28 : vector<8x128xi32>
    %30 = arith.addi %29, %24 : vector<8x128xi32>
    %c8_i32_8 = arith.constant 8 : i32
    %31 = vector.broadcast %c8_i32_8 : i32 to vector<8x128xi32>
    %32 = arith.cmpi slt, %30, %31 : vector<8x128xi32>
    %33 = arith.addf %12, %22 : vector<8x128xf32>
    %cst_9 = arith.constant 0.000000e+00 : f32
    %34 = vector.broadcast %cst_9 : f32 to vector<8x128xf32>
    %35 = arith.select %32, %33, %34 : vector<8x128xi1>, vector<8x128xf32>
    %c0_10 = arith.constant 0 : index
    %c0_11 = arith.constant 0 : index
    %36 = memref.load %arg3[%c0_10, %c0_11] : memref<1x1xf32, #tpu.memory_space<smem>>
    %37 = vector.shape_cast %35 : vector<8x128xf32> to vector<1x8x128xf32>
    %cst_12 = arith.constant dense<0.000000e+00> : vector<1xf32>
    %38 = vector.multi_reduction <add>, %37, %cst_12 [1, 2] : vector<1x8x128xf32> to vector<1xf32>
    %39 = vector.shape_cast %38 : vector<1xf32> to vector<1x1x1xf32>
    %40 = vector.extract %39[0, 0, 0] : f32 from vector<1x1x1xf32>
    %41 = arith.addf %36, %40 : f32
    %c0_13 = arith.constant 0 : index
    %c0_14 = arith.constant 0 : index
    %42 = memref.load %arg3[%c0_13, %c0_14] : memref<1x1xf32, #tpu.memory_space<smem>>
    memref.store %41, %arg3[%c0_13, %c0_14] : memref<1x1xf32, #tpu.memory_space<smem>>
    %c0_i32_15 = arith.constant 0 : i32
    %43 = arith.cmpi eq, %arg0, %c0_i32_15 : i32
    %44 = arith.extui %43 : i1 to i32
    %c0_i32_16 = arith.constant 0 : i32
    %45 = arith.cmpi ne, %44, %c0_i32_16 : i32
    scf.if %45 {
      %c0_17 = arith.constant 0 : index
      %c0_18 = arith.constant 0 : index
      %46 = memref.load %arg3[%c0_17, %c0_18] : memref<1x1xf32, #tpu.memory_space<smem>>
      %cst_19 = arith.constant 1.250000e-01 : f32
      %47 = arith.mulf %46, %cst_19 : f32
      %c0_20 = arith.constant 0 : index
      %c0_21 = arith.constant 0 : index
      %48 = memref.load %arg3[%c0_20, %c0_21] : memref<1x1xf32, #tpu.memory_space<smem>>
      memref.store %47, %arg3[%c0_20, %c0_21] : memref<1x1xf32, #tpu.memory_space<smem>>
    } else {
    }
    return
  }
  func.func @transform_0(%arg0: i32) -> (i32, i32) {
    %c0_i32 = arith.constant 0 : i32
    %c0_i32_0 = arith.constant 0 : i32
    return %arg0, %c0_i32 : i32, i32
  }
  func.func @transform_1(%arg0: i32) -> (i32, i32) {
    %c0_i32 = arith.constant 0 : i32
    %c0_i32_0 = arith.constant 0 : i32
    return %arg0, %c0_i32 : i32, i32
  }
  func.func @transform_2(%arg0: i32) -> (i32, i32) {
    %c0_i32 = arith.constant 0 : i32
    %c0_i32_0 = arith.constant 0 : i32
    %c0_i32_1 = arith.constant 0 : i32
    return %c0_i32, %c0_i32_0 : i32, i32
  }
}

</mosaic_0001>

<llo_original>
// kernel: tpu_custom_call.1
$region0: #{tpu_custom_call.1}
  #allocation0 [shape = 'u32[]', space=smem, size = 0x4, offset = 0x4, fixed_abs, tag = 'smem constant byte address 0x4 - core index']
  #allocation1 [shape = 'u32[144,128]{1,0:T(1,128)}', space=vmem, size = 0x12000, scoped, tag = 'internal scratch']
  %s0 = inlined_call_operand.hbm [shape: f32[8,128], index: 0, kind: input, shape index: {}]
  %s1 = inlined_call_operand.hbm [shape: f32[8,128], index: 1, kind: input, shape index: {}]
  %s2 = inlined_call_operand.hbm [shape: f32[1,1], index: 2, kind: output, shape index: {}]
  %s3 = sld [smem:[#allocation0]]
  $region34: #{tpu_custom_call.1} parent=0
    _
  %s5 = ssub.s32 1, %s3
  %s6 = scalar_select 0, %s5, %s3
  $region1: #{tpu_custom_call.1} parent=0
    #allocation2 [shape = 'u8[4096]{0}', space=vmem, size = 0x1000, scoped, tag = 'input window, operand 0, single buffered']
    #allocation3 [shape = 's32[1]{0}', space=sflag, size = 0x4, scoped, tag = 'scoped memory for tpu_custom_call.1']
    #allocation4 [shape = 's32[1]{0}', space=sflag, size = 0x4, scoped, tag = 'scoped memory for tpu_custom_call.1']
    #allocation5 [shape = 'u8[4096]{0}', space=vmem, size = 0x1000, scoped, tag = 'input window, operand 1, single buffered']
    #allocation6 [shape = 's32[1]{0}', space=sflag, size = 0x4, scoped, tag = 'scoped memory for tpu_custom_call.1']
    #allocation7 [shape = 'u8[512]{0}', space=smem, size = 0x200, scoped, tag = 'output window, operand 0, single buffered']
    %7 = vsyncpa [#allocation3], 0
    %8 = vsyncpa [#allocation6], 0
    %9 = vsyncpa [#allocation4], 0
    // Predicated region
    $region2: #{tpu_custom_call.1} parent=1 // pred_check
      _
    $region3: #{tpu_custom_call.1} parent=1 // pred_check_branch
      %11 = sbr.rel (0) target = $region5
    $region4: #{tpu_custom_call.1} parent=1 // pred_region
      %s13 = ssub.s32 128, 128
      %14 = vsyncadd [#allocation3], %s13
      %s16 = sshll.u32 [#allocation2], 4
      %s17 = int_to_ptr.vmem [resolvable:$true] %s16
      %19 = dma.hbm_to_vmem [thread:$0]  %s0, 128, %s17, [#allocation3]
    $region5: #{tpu_custom_call.1} parent=1 // pred_fallthru
      _
    // Predicated region
    $region6: #{tpu_custom_call.1} parent=1 // pred_check
      _
    $region7: #{tpu_custom_call.1} parent=1 // pred_check_branch
      %21 = sbr.rel (0) target = $region9
    $region8: #{tpu_custom_call.1} parent=1 // pred_region
      %s23 = ssub.s32 128, 128
      %24 = vsyncadd [#allocation6], %s23
      %s26 = sshll.u32 [#allocation5], 4
      %s27 = int_to_ptr.vmem [resolvable:$true] %s26
      %29 = dma.hbm_to_vmem [thread:$0]  %s1, 128, %s27, [#allocation6]
    $region9: #{tpu_custom_call.1} parent=1 // pred_fallthru
      _
    // Predicated region
    $region10: #{tpu_custom_call.1} parent=1 // pred_check
      _
    $region11: #{tpu_custom_call.1} parent=1 // pred_check_branch
      %31 = sbr.rel (0) target = $region13
    $region12: #{tpu_custom_call.1} parent=1 // pred_region
      %32 = dma.done [#allocation3], 128
    $region13: #{tpu_custom_call.1} parent=1 // pred_fallthru
      _
    // Predicated region
    $region14: #{tpu_custom_call.1} parent=1 // pred_check
      _
    $region15: #{tpu_custom_call.1} parent=1 // pred_check_branch
      %34 = sbr.rel (0) target = $region17
    $region16: #{tpu_custom_call.1} parent=1 // pred_region
      %35 = dma.done [#allocation6], 128
    $region17: #{tpu_custom_call.1} parent=1 // pred_fallthru
      _
    %p36 = scmp.eq.s32.totalorder 0, 0
    // Predicated region
    $region18: #{tpu_custom_call.1} parent=1 // pred_check
      %p37 = pneg %p36
    $region19: #{tpu_custom_call.1} parent=1 // pred_check_branch
      %39 = sbr.rel (%p37) target = $region21
    $region20: #{tpu_custom_call.1} parent=1 // pred_region
      %s40 = scalar_lea.smem [#allocation7], 0
      %41 = sst [smem:[%s40]] 0.0
    $region21: #{tpu_custom_call.1} parent=1 // pred_fallthru
      _
    %v42 = vld [vmem:[#allocation2] sm:$0xff]
    %v43 = vld [vmem:[#allocation5] sm:$0xff]
    %v44 = vmax.f32 %v42, 0.0
    %v45 = vand.u32 2147483647, %v42
    %v46 = vsub.f32 0.0, %v45
    %v47 = vmul.f32 %v46, 1.442695
    %v48 = vpow.pop %v47
    %v49 = vadd.f32 %v48, 1.0
    %v50 = vlog2.pop %v49
    %v51 = vmul.f32 %v50, 0.6931472
    %v52 = vmul.f32 -0.5, %v48
    %v53 = vadd.f32 %v52, 1.0
    %v54 = vmul.f32 %v53, %v48
    %v55 = vand.u32 2147483647, %v48
    %vm56 = vcmp.lt.f32.partialorder %v55, 0.0004427343
    %v57 = vsel %vm56, %v54, %v51
    %v58 = vadd.f32 %v44, %v57
    %v59 = vsub.f32 0.0, %v43
    %v60 = vmax.f32 %v59, 0.0
    %v61 = vand.u32 2147483647, %v43
    %v62 = vsub.f32 0.0, %v61
    %v63 = vmul.f32 %v62, 1.442695
    %v64 = vpow.pop %v63
    %v65 = vadd.f32 %v64, 1.0
    %v66 = vlog2.pop %v65
    %v67 = vmul.f32 %v66, 0.6931472
    %v68 = vmul.f32 -0.5, %v64
    %v69 = vadd.f32 %v68, 1.0
    %v70 = vmul.f32 %v69, %v64
    %v71 = vand.u32 2147483647, %v64
    %vm72 = vcmp.lt.f32.partialorder %v71, 0.0004427343
    %v73 = vsel %vm72, %v70, %v67
    %v74 = vadd.f32 %v60, %v73
    %v75 = vlaneseq
    %v76 = vshrl.u32 %v75, 7
    %v77 = vlaneseq
    %v78 = vand.u32 %v77, 127
    %s79 = smul.u32 0, 8
    %v80 = vstv %s79
    %v81 = vadd.s32 %v80, %v76
    %v82 = vmul.u32 %v81, 128
    %v83 = vadd.s32 %v82, %v78
    %vm84 = vcmp.lt.s32.totalorder %v83, 8
    %v85 = vadd.f32 %v58, %v74
    %v86 = vsel %vm84, %v85, 0.0
    %s87 = sld [smem:[#allocation7]]
    %88 = vadd.xlane.f32.xlu0 %v86
    %v89 = vpop.xlane.xlu0 %88
    %v90 = vrot.slane %v89, 4
    %v91 = vadd.f32 %v89, %v90
    %v92 = vrot.slane %v91, 2
    %v93 = vadd.f32 %v91, %v92
    %v94 = vrot.slane %v93, 1
    %v95 = vadd.f32 %v93, %v94
    %s96 = vtos %v95
    %s97 = sadd.f32 %s87, %s96
    %s98 = scalar_lea.smem [#allocation7], 0
    %99 = sst [smem:[%s98]] %s97
    // Predicated region
    $region22: #{tpu_custom_call.1} parent=1 // pred_check
      %p100 = pneg %p36
    $region23: #{tpu_custom_call.1} parent=1 // pred_check_branch
      %102 = sbr.rel (%p100) target = $region25
    $region24: #{tpu_custom_call.1} parent=1 // pred_region
      %s103 = sld [smem:[#allocation7]]
      %s104 = smul.f32 %s103, 0.125
      %105 = sst [smem:[%s98]] %s104
    $region25: #{tpu_custom_call.1} parent=1 // pred_fallthru
      _
    // Predicated region
    $region26: #{tpu_custom_call.1} parent=1 // pred_check
      _
    $region27: #{tpu_custom_call.1} parent=1 // pred_check_branch
      %107 = sbr.rel (0) target = $region29
    $region28: #{tpu_custom_call.1} parent=1 // pred_region
      %s109 = ssub.s32 16, 16
      %110 = vsyncadd [#allocation4], %s109
      %113 = dma.smem_to_hbm [#allocation7], 16, %s2, [#allocation4]
    $region29: #{tpu_custom_call.1} parent=1 // pred_fallthru
      _
    // Predicated region
    $region30: #{tpu_custom_call.1} parent=1 // pred_check
      _
    $region31: #{tpu_custom_call.1} parent=1 // pred_check_branch
      %115 = sbr.rel (0) target = $region33
    $region32: #{tpu_custom_call.1} parent=1 // pred_region
      %116 = dma.done [#allocation4], 16
    $region33: #{tpu_custom_call.1} parent=1 // pred_fallthru
      _
    %117 = sfence
    %118 = vsyncpa [#allocation3], 1
    %119 = vsyncpa [#allocation6], 1
    %120 = vsyncpa [#allocation4], 1

</llo_original>
